<compile_context>
chip_gen: v7x
topology: tpu7x:2x2x1
jax: 0.10.0
libtpu: 0.0.40
codegen_flags: <defaults>
</compile_context>

<pallas_src>
import math

import jax
import jax.numpy as jnp
from jax.experimental import pallas as pl
from jax.experimental.pallas import tpu as pltpu


def _build_pe_table(d_model: int, max_len: int) -> jnp.ndarray:
    """Deterministic sinusoidal table; matches the PyTorch __init__ exactly."""
    position = jnp.arange(max_len, dtype=jnp.float32)[:, None]          # (L, 1)
    div_term = jnp.exp(
        jnp.arange(0, d_model, 2, dtype=jnp.float32)
        * (-math.log(10000.0) / d_model)
    )                                                                    # (D/2,)
    pe = jnp.zeros((max_len, d_model), dtype=jnp.float32)
    pe = pe.at[:, 0::2].set(jnp.sin(position * div_term))
    pe = pe.at[:, 1::2].set(jnp.cos(position * div_term))
    return pe                                                            # (L, D)


def _choose_tile_rows(n_rows: int, row_bytes: int, itemsize: int) -> int:
    """Sequence-tile size: sublane-aligned, ~2 MiB per block, and enough grid
    steps at large sizes for double-buffered pipelining + v7x megacore."""
    sublane = max(8, 32 // max(itemsize, 1))      # 8 f32, 16 bf16, 32 int8
    target_bytes = 2 << 20                        # ~2 MiB x-block; ~12 MiB total
    ts = max(1, target_bytes // max(row_bytes, 1))
    ts = min(ts, max(1, n_rows // 8))             # keep >= ~8 grid steps if possible
    ts = max(sublane, (ts // sublane) * sublane)
    if ts >= n_rows:
        return n_rows                             # tiny input: one full block
    return ts


def _pe_add_kernel_2d(x_ref, pe_ref, o_ref):
    # Lane-dense path: x/pe/out blocks are all (ts, B*D).
    o_ref[...] = x_ref[...] + pe_ref[...]


def _pe_add_kernel_3d(x_ref, pe_ref, o_ref):
    # Lane-aligned path: x block (ts, B, D), pe block (ts, D), broadcast over B.
    o_ref[...] = x_ref[...] + pe_ref[...][:, None, :]


def positional_encoding(x: jnp.ndarray, pe: jnp.ndarray, *,
                        donate_x: bool = False) -> jnp.ndarray:
    """x: (S, B, D); pe: (max_len, D). Returns x + pe[:S] broadcast over B."""
    S, B, D = x.shape
    max_len = pe.shape[0]
    if S > max_len:
        raise ValueError(f"seq_len {S} exceeds positional-encoding max_len {max_len}")

    itemsize = jnp.dtype(x.dtype).itemsize
    pe_s = pe[:S].astype(x.dtype)        # cast once in the wrapper (not per step)
    # NOTE: bf16 x loses a little precision vs PyTorch's f32-promoted add.

    io_alias = {0: 0} if donate_x else {}
    cparams = pltpu.CompilerParams(dimension_semantics=("parallel",))

    # Keep the native 3-D layout only when it is already lane/sublane dense:
    # D a multiple of 128 (full lanes, unmasked vst) and B filling the sublanes.
    lane_dense_3d = (D % 128 == 0) and (B * itemsize >= 32)

    if lane_dense_3d:
        ts = _choose_tile_rows(S, B * D * itemsize, itemsize)
        return pl.pallas_call(
            _pe_add_kernel_3d,
            out_shape=jax.ShapeDtypeStruct((S, B, D), x.dtype),
            grid=(pl.cdiv(S, ts),),
            in_specs=[
                pl.BlockSpec((ts, B, D), lambda i: (i, 0, 0)),
                pl.BlockSpec((ts, D), lambda i: (i, 0)),
            ],
            out_specs=pl.BlockSpec((ts, B, D), lambda i: (i, 0, 0)),
            input_output_aliases=io_alias,
            compiler_params=cparams,
        )(x, pe_s)

    # Lane-dense 2-D path: flatten (B, D) into the lane dimension.
    C = B * D
    x2 = x.reshape(S, C)                                        # free, contiguous
    pe_w = jnp.broadcast_to(pe_s[:, None, :], (S, B, D)).reshape(S, C)
    ts = _choose_tile_rows(S, C * itemsize, itemsize)
    out2 = pl.pallas_call(
        _pe_add_kernel_2d,
        out_shape=jax.ShapeDtypeStruct((S, C), x.dtype),
        grid=(pl.cdiv(S, ts),),
        in_specs=[
            pl.BlockSpec((ts, C), lambda i: (i, 0)),
            pl.BlockSpec((ts, C), lambda i: (i, 0)),
        ],
        out_specs=pl.BlockSpec((ts, C), lambda i: (i, 0)),
        input_output_aliases=io_alias,
        compiler_params=cparams,
    )(x2, pe_w)
    return out2.reshape(S, B, D)


if __name__ == "__main__":
    key = jax.random.PRNGKey(0)

    # 1) Small demo shape from the module (D < 128, tiny B) -> 2-D lane-dense path.
    d_model, max_len, seq_len, batch = 32, 64, 8, 2
    pe_table = _build_pe_table(d_model, max_len)
    x = jax.random.normal(key, (seq_len, batch, d_model), dtype=jnp.float32)
    out = jax.block_until_ready(positional_encoding(x, pe_table))
    ref = x + pe_table[:seq_len][:, None, :]
    assert out.shape == (seq_len, batch, d_model)
    assert jnp.allclose(out, ref, atol=1e-6), "mismatch vs reference (2D path)"

    # 2) Lane-aligned shape (D % 128 == 0, B >= 8) -> 3-D path, multi-step grid.
    d2, max_len2, seq2, batch2 = 128, 64, 16, 8
    pe2 = _build_pe_table(d2, max_len2)
    x2 = jax.random.normal(jax.random.PRNGKey(0), (seq2, batch2, d2),
                           dtype=jnp.float32)
    out2 = jax.block_until_ready(positional_encoding(x2, pe2))
    ref2 = x2 + pe2[:seq2][:, None, :]
    assert jnp.allclose(out2, ref2, atol=1e-6), "mismatch vs reference (3D path)"

    print("KERNEL_OK")
</pallas_src>

<mosaic_0001>
module attributes {stable_mosaic.version = 11 : i64} {
  func.func @_pe_add_kernel_2d(%arg0: i32, %arg1: memref<8x64xf32, #tpu.memory_space<vmem>>, %arg2: memref<8x64xf32, #tpu.memory_space<vmem>>, %arg3: memref<8x64xf32, #tpu.memory_space<vmem>>) attributes {dimension_semantics = [#tpu.dimension_semantics<parallel>], iteration_bounds = array<i64: 1>, scalar_prefetch = 0 : i64, scratch_operands = 0 : i64, tpu.core_type = #tpu.core_type<tc>, window_params = [{transform_indices = @transform_0, window_bounds = array<i64: 8, 64>}, {transform_indices = @transform_1, window_bounds = array<i64: 8, 64>}, {transform_indices = @transform_2, window_bounds = array<i64: 8, 64>}]} {
    %c0 = arith.constant 0 : index
    %c0_0 = arith.constant 0 : index
    %0 = vector.load %arg1[%c0, %c0_0] : memref<8x64xf32, #tpu.memory_space<vmem>>, vector<8x64xf32>
    %c0_1 = arith.constant 0 : index
    %c0_2 = arith.constant 0 : index
    %1 = vector.load %arg2[%c0_1, %c0_2] : memref<8x64xf32, #tpu.memory_space<vmem>>, vector<8x64xf32>
    %2 = arith.addf %0, %1 : vector<8x64xf32>
    %c0_3 = arith.constant 0 : index
    %c0_4 = arith.constant 0 : index
    %3 = vector.load %arg3[%c0_3, %c0_4] : memref<8x64xf32, #tpu.memory_space<vmem>>, vector<8x64xf32>
    tpu.vector_store %arg3[%c0_3, %c0_4], %2 {strides = array<i32>} : memref<8x64xf32, #tpu.memory_space<vmem>>, vector<8x64xf32>,
    return
  }
  func.func @transform_0(%arg0: i32) -> (i32, i32) {
    %c0_i32 = arith.constant 0 : i32
    %c0_i32_0 = arith.constant 0 : i32
    return %arg0, %c0_i32 : i32, i32
  }
  func.func @transform_1(%arg0: i32) -> (i32, i32) {
    %c0_i32 = arith.constant 0 : i32
    %c0_i32_0 = arith.constant 0 : i32
    return %arg0, %c0_i32 : i32, i32
  }
  func.func @transform_2(%arg0: i32) -> (i32, i32) {
    %c0_i32 = arith.constant 0 : i32
    %c0_i32_0 = arith.constant 0 : i32
    return %arg0, %c0_i32 : i32, i32
  }
}

</mosaic_0001>

<llo_original>
// kernel: tpu_custom_call.1
$region0: #{tpu_custom_call.1}
  #allocation0 [shape = 'u32[]', space=smem, size = 0x4, offset = 0x4, fixed_abs, tag = 'smem constant byte address 0x4 - core index']
  #allocation1 [shape = 'u32[144,128]{1,0:T(1,128)}', space=vmem, size = 0x12000, scoped, tag = 'internal scratch']
  %s0 = inlined_call_operand.hbm [shape: f32[8,64], index: 0, kind: input, shape index: {}]
  %s1 = inlined_call_operand.hbm [shape: f32[8,64], index: 1, kind: input, shape index: {}]
  %s2 = inlined_call_operand.hbm [shape: f32[8,64], index: 2, kind: output, shape index: {}]
  %s3 = sld [smem:[#allocation0]]
  $region26: #{tpu_custom_call.1} parent=0
    _
  %s5 = ssub.s32 1, %s3
  %s6 = scalar_select 0, %s5, %s3
  $region1: #{tpu_custom_call.1} parent=0
    #allocation2 [shape = 'u8[4096]{0}', space=vmem, size = 0x1000, scoped, tag = 'input window, operand 0, single buffered']
    #allocation3 [shape = 's32[1]{0}', space=sflag, size = 0x4, scoped, tag = 'scoped memory for tpu_custom_call.1']
    #allocation4 [shape = 's32[1]{0}', space=sflag, size = 0x4, scoped, tag = 'scoped memory for tpu_custom_call.1']
    #allocation5 [shape = 'u8[4096]{0}', space=vmem, size = 0x1000, scoped, tag = 'input window, operand 1, single buffered']
    #allocation6 [shape = 's32[1]{0}', space=sflag, size = 0x4, scoped, tag = 'scoped memory for tpu_custom_call.1']
    #allocation7 [shape = 'u8[4096]{0}', space=vmem, size = 0x1000, scoped, tag = 'output window, operand 0, single buffered']
    %7 = vsyncpa [#allocation3], 0
    %8 = vsyncpa [#allocation6], 0
    %9 = vsyncpa [#allocation4], 0
    // Predicated region
    $region2: #{tpu_custom_call.1} parent=1 // pred_check
      _
    $region3: #{tpu_custom_call.1} parent=1 // pred_check_branch
      %11 = sbr.rel (0) target = $region5
    $region4: #{tpu_custom_call.1} parent=1 // pred_region
      %s13 = ssub.s32 128, 128
      %14 = vsyncadd [#allocation3], %s13
      %s16 = sshll.u32 [#allocation2], 4
      %s17 = int_to_ptr.vmem [resolvable:$true] %s16
      %19 = dma.hbm_to_vmem [thread:$0]  %s0, 128, %s17, [#allocation3]
    $region5: #{tpu_custom_call.1} parent=1 // pred_fallthru
      _
    // Predicated region
    $region6: #{tpu_custom_call.1} parent=1 // pred_check
      _
    $region7: #{tpu_custom_call.1} parent=1 // pred_check_branch
      %21 = sbr.rel (0) target = $region9
    $region8: #{tpu_custom_call.1} parent=1 // pred_region
      %s23 = ssub.s32 128, 128
      %24 = vsyncadd [#allocation6], %s23
      %s26 = sshll.u32 [#allocation5], 4
      %s27 = int_to_ptr.vmem [resolvable:$true] %s26
      %29 = dma.hbm_to_vmem [thread:$0]  %s1, 128, %s27, [#allocation6]
    $region9: #{tpu_custom_call.1} parent=1 // pred_fallthru
      _
    // Predicated region
    $region10: #{tpu_custom_call.1} parent=1 // pred_check
      _
    $region11: #{tpu_custom_call.1} parent=1 // pred_check_branch
      %31 = sbr.rel (0) target = $region13
    $region12: #{tpu_custom_call.1} parent=1 // pred_region
      %32 = dma.done [#allocation3], 128
    $region13: #{tpu_custom_call.1} parent=1 // pred_fallthru
      _
    // Predicated region
    $region14: #{tpu_custom_call.1} parent=1 // pred_check
      _
    $region15: #{tpu_custom_call.1} parent=1 // pred_check_branch
      %34 = sbr.rel (0) target = $region17
    $region16: #{tpu_custom_call.1} parent=1 // pred_region
      %35 = dma.done [#allocation6], 128
    $region17: #{tpu_custom_call.1} parent=1 // pred_fallthru
      _
    %v36 = vld [vmem:[#allocation2] sm:$0xff]
    %v37 = vld [vmem:[#allocation5] sm:$0xff]
    %v38 = vadd.f32 %v36, %v37
    %vm39 = vcmask 523264
    %40 = vst.msk [vmem:[#allocation7] sm:$0xff] %vm39, %v38
    // Predicated region
    $region18: #{tpu_custom_call.1} parent=1 // pred_check
      _
    $region19: #{tpu_custom_call.1} parent=1 // pred_check_branch
      %42 = sbr.rel (0) target = $region21
    $region20: #{tpu_custom_call.1} parent=1 // pred_region
      %s44 = ssub.s32 128, 128
      %45 = vsyncadd [#allocation4], %s44
      %s47 = sshll.u32 [#allocation7], 4
      %s48 = int_to_ptr.vmem [resolvable:$true] %s47
      %50 = dma.vmem_to_hbm [thread:$0]  %s48, 128, %s2, [#allocation4]
    $region21: #{tpu_custom_call.1} parent=1 // pred_fallthru
      _
    // Predicated region
    $region22: #{tpu_custom_call.1} parent=1 // pred_check
      _
    $region23: #{tpu_custom_call.1} parent=1 // pred_check_branch
      %52 = sbr.rel (0) target = $region25
    $region24: #{tpu_custom_call.1} parent=1 // pred_region
      %53 = dma.done [#allocation4], 128
    $region25: #{tpu_custom_call.1} parent=1 // pred_fallthru
      _
    %54 = vsyncpa [#allocation3], 1
    %55 = vsyncpa [#allocation6], 1
    %56 = vsyncpa [#allocation4], 1

</llo_original>
